<compile_context>
chip_gen: v7x
topology: tpu7x:2x2x1
jax: 0.10.0
libtpu: 0.0.40
codegen_flags: <defaults>
</compile_context>

<pallas_src>
import jax
import jax.numpy as jnp
from jax.experimental import pallas as pl
from jax.experimental.pallas import tpu as pltpu

# ----------------------------------------------------------------------------
# Model configuration
# ----------------------------------------------------------------------------

NODE = 16      # number of graph nodes (N)
TSTEP = 8      # input time steps (T)
IN_F = 4       # gcn1_in_feature
GCN1_OUT = 8   # gcn1_out_feature
GCN2_OUT = 8   # gcn2_out_feature
NB_TF = 16     # nb_time_filter
PRE_LEN = 4    # pre_len
T_STRIDE = 1   # time_strides (fused kernel supports stride 1)
BATCH = 2


# ----------------------------------------------------------------------------
# Fused Pallas kernel: one invocation for the whole batch, everything in VMEM
# ----------------------------------------------------------------------------

def _mcstgcn_kernel(x_ref, a_ref, wg1_ref, wg2_ref, wt_ref, wr_ref,
                    avg_ref, wf_ref, vec_ref, o_ref):
    # x_ref  : (B*N, T*F)        rows (b,n)-ordered, cols (t,f)-ordered
    # a_ref  : (B*N, B*N)        kron(I_B, adj)
    # wg1_ref: (T*F,  T*G1)      kron(I_T, Wg1)
    # wg2_ref: (T*G1, T*G2)      kron(I_T, Wg2)
    # wt_ref : (T*G2, T*C)       block-tridiagonal (1,3) time-conv weight
    # wr_ref : (T*F,  T*C)       kron(I_T, Wr) residual 1x1 conv weight
    # avg_ref: (T*C,  T*C)       kron(I_T, ones(C,C)/C)  (LayerNorm group mean)
    # wf_ref : (T*C,  PRE_LEN)   final-conv weight, row (t*C+o) -> fin_w[p,t,0,o]
    # vec_ref: (4, T*C)          [time_b+res_b | ln_gamma | ln_beta | fin_b pad]
    # o_ref  : (B*N, PRE_LEN)
    f32 = jnp.float32

    x = x_ref[...]                                  # (B*N, T*F)
    a = a_ref[...]                                  # (B*N, B*N)

    # ---- 2-layer GCN: relu(A @ (X @ Wg1)) -> relu(A @ (h1 @ Wg2)) ----------
    h1 = jnp.maximum(
        jnp.dot(a, jnp.dot(x, wg1_ref[...], preferred_element_type=f32),
                preferred_element_type=f32), 0.0)   # (B*N, T*G1)
    h2 = jnp.maximum(
        jnp.dot(a, jnp.dot(h1, wg2_ref[...], preferred_element_type=f32),
                preferred_element_type=f32), 0.0)   # (B*N, T*G2)

    vecs = vec_ref[...]                             # (4, T*C)

    # ---- time_conv (3 taps fused via block-tridiag weight) + residual ------
    z = jnp.maximum(
        jnp.dot(h2, wt_ref[...], preferred_element_type=f32)
        + jnp.dot(x, wr_ref[...], preferred_element_type=f32)
        + vecs[0:1, :], 0.0)                        # (B*N, T*C)

    # ---- LayerNorm over the filter axis (C-column groups) ------------------
    mu = jnp.dot(z, avg_ref[...], preferred_element_type=f32)
    var = jnp.dot(z * z, avg_ref[...], preferred_element_type=f32) - mu * mu
    y = (z - mu) * jax.lax.rsqrt(var + 1e-5) * vecs[1:2, :] + vecs[2:3, :]

    # ---- final_conv: one K = T*C matmul -------------------------------------
    o_ref[...] = (jnp.dot(y, wf_ref[...], preferred_element_type=f32)
                  + vecs[3:4, 0:PRE_LEN])           # (B*N, PRE_LEN)


# ----------------------------------------------------------------------------
# Wrapper: block-structured weight prep (tiny, once per call) + pallas_call
# ----------------------------------------------------------------------------

def mcstgcn_forward(params, x_in, adj):
    """x_in: (B, N, T, F); adj: (N, N)  ->  (B, N, PRE_LEN, 1)."""
    B, N, T, F_in = x_in.shape
    assert (N, T, F_in) == (NODE, TSTEP, IN_F), (x_in.shape,)
    assert T_STRIDE == 1
    BN, C = B * N, NB_TF
    eye_t = jnp.eye(T, dtype=jnp.float32)

    # (b,n)-row, (t,*)-column slab: pure reshape, no transpose needed.
    x_flat = x_in.reshape(BN, T * F_in)

    # Block-structured weights (all tiny; XLA constant-folds / fuses these).
    a_blk = jnp.kron(jnp.eye(B, dtype=jnp.float32), adj)                 # (BN, BN)
    wg1_blk = jnp.kron(eye_t, params["Wg1"])                             # (T*F, T*G1)
    wg2_blk = jnp.kron(eye_t, params["Wg2"])                             # (T*G1, T*G2)

    # (1,3) time conv: tap k maps input time t-1+k to output time t
    #   => block-tridiagonal  sum_k kron(eye(T, k=1-k), tw_k^T)
    tw = params["time_w"][:, :, 0, :]                                    # (C, G2, 3)
    wt_blk = sum(jnp.kron(jnp.eye(T, k=1 - tap, dtype=jnp.float32),
                          tw[:, :, tap].T) for tap in range(3))          # (T*G2, T*C)
    wr_blk = jnp.kron(eye_t, params["res_w"][:, :, 0, 0].T)              # (T*F, T*C)

    # LayerNorm group-mean operator and final-conv weight.
    avg = jnp.kron(eye_t, jnp.full((C, C), 1.0 / C, jnp.float32))        # (T*C, T*C)
    wf_flat = jnp.transpose(params["fin_w"][:, :, 0, :], (1, 2, 0)).reshape(
        T * C, PRE_LEN)                                                  # (T*C, P)

    # Packed small vectors: combined conv bias, LN gamma/beta, padded final bias.
    vecs = jnp.stack([
        jnp.tile(params["time_b"] + params["res_b"], T),
        jnp.tile(params["ln_g"], T),
        jnp.tile(params["ln_b"], T),
        jnp.zeros((T * C,), jnp.float32).at[:PRE_LEN].set(params["fin_b"]),
    ], axis=0)                                                           # (4, T*C)

    def full_spec(shape):
        return pl.BlockSpec(shape, lambda i, _s=shape: (0,) * len(_s))

    operands = (x_flat, a_blk, wg1_blk, wg2_blk, wt_blk, wr_blk,
                avg, wf_flat, vecs)

    out = pl.pallas_call(
        _mcstgcn_kernel,
        out_shape=jax.ShapeDtypeStruct((BN, PRE_LEN), jnp.float32),
        grid=(1,),
        in_specs=[full_spec(op.shape) for op in operands],
        out_specs=full_spec((BN, PRE_LEN)),
        compiler_params=pltpu.CompilerParams(
            dimension_semantics=("arbitrary",)),
    )(*operands)
    return out.reshape(B, N, PRE_LEN, 1)


# ----------------------------------------------------------------------------
# Pure-JAX reference (mirrors the PyTorch MCSTGCN forward) for verification
# ----------------------------------------------------------------------------

def mcstgcn_reference(params, x_in, adj):
    B, N, T, F_in = x_in.shape
    x = jnp.transpose(x_in, (0, 1, 3, 2))                               # (B,N,F,T)
    ax = jnp.einsum("nm,bmft->bnft", adj, x)
    h1 = jax.nn.relu(jnp.einsum("bnft,fg->bngt", ax, params["Wg1"]))
    ah = jnp.einsum("nm,bmgt->bngt", adj, h1)
    h2 = jax.nn.relu(jnp.einsum("bngt,gh->bnht", ah, params["Wg2"]))    # (B,N,G2,T)
    hp = jnp.pad(h2, ((0, 0), (0, 0), (0, 0), (1, 1)))
    tw = params["time_w"][:, :, 0, :]                                   # (O,G2,3)
    tco = sum(jnp.einsum("bnct,oc->bnto", hp[..., k:k + T], tw[:, :, k])
              for k in range(3)) + params["time_b"]                     # (B,N,T,O)
    rco = jnp.einsum("bntf,fo->bnto", x_in,
                     jnp.transpose(params["res_w"][:, :, 0, 0])) + params["res_b"]
    z = jax.nn.relu(rco + tco)
    mu = jnp.mean(z, axis=-1, keepdims=True)
    var = jnp.mean(jnp.square(z - mu), axis=-1, keepdims=True)
    y = (z - mu) * jax.lax.rsqrt(var + 1e-5) * params["ln_g"] + params["ln_b"]
    fw = params["fin_w"][:, :, 0, :]                                    # (P,T,O)
    pred = jnp.einsum("bnto,pto->bnp", y, fw) + params["fin_b"]
    return pred[..., None]


# ----------------------------------------------------------------------------
# Parameters & demo
# ----------------------------------------------------------------------------

def init_params(key):
    def nrm(k, shape, scale=0.1):
        return jax.random.normal(k, shape, jnp.float32) * scale

    ks = jax.random.split(key, 8)
    return {
        # 2-layer GCN (canonical relu(A X W), no bias)
        "Wg1": nrm(ks[0], (IN_F, GCN1_OUT)),
        "Wg2": nrm(ks[1], (GCN1_OUT, GCN2_OUT)),
        # time_conv: Conv2d(G2, NB_TF, (1,3), stride (1,ts), padding (0,1))
        "time_w": nrm(ks[2], (NB_TF, GCN2_OUT, 1, 3)),
        "time_b": nrm(ks[3], (NB_TF,), 0.01),
        # residual_conv: Conv2d(F, NB_TF, (1,1), stride (1,ts))
        "res_w": nrm(ks[4], (NB_TF, IN_F, 1, 1)),
        "res_b": nrm(ks[5], (NB_TF,), 0.01),
        # LayerNorm(NB_TF)
        "ln_g": jnp.ones((NB_TF,), jnp.float32),
        "ln_b": jnp.zeros((NB_TF,), jnp.float32),
        # final_conv: Conv2d(T // ts, PRE_LEN, (1, NB_TF))
        "fin_w": nrm(ks[6], (PRE_LEN, TSTEP // T_STRIDE, 1, NB_TF)),
        "fin_b": nrm(ks[7], (PRE_LEN,), 0.01),
    }


if __name__ == "__main__":
    key = jax.random.PRNGKey(0)
    k_p, k_x, k_a = jax.random.split(key, 3)

    params = init_params(k_p)
    x = jax.random.normal(k_x, (BATCH, NODE, TSTEP, IN_F), jnp.float32)
    adj_raw = jax.random.uniform(k_a, (NODE, NODE), jnp.float32)
    adj = 0.5 * (adj_raw + adj_raw.T) + jnp.eye(NODE, dtype=jnp.float32)
    adj = adj / jnp.sum(adj, axis=-1, keepdims=True)   # row-normalized adjacency

    fwd = jax.jit(mcstgcn_forward)
    out = jax.block_until_ready(fwd(params, x, adj))
    assert out.shape == (BATCH, NODE, PRE_LEN, 1), out.shape
    assert bool(jnp.all(jnp.isfinite(out)))

    ref = jax.block_until_ready(jax.jit(mcstgcn_reference)(params, x, adj))
    assert bool(jnp.allclose(out, ref, rtol=1e-4, atol=1e-4)), (
        "max abs diff vs reference: %e" % float(jnp.max(jnp.abs(out - ref))))

    print("KERNEL_OK")
</pallas_src>

<mosaic_0001>
module attributes {stable_mosaic.version = 11 : i64} {
  func.func @_mcstgcn_kernel(%arg0: i32, %arg1: memref<32x32xf32, #tpu.memory_space<vmem>>, %arg2: memref<32x32xf32, #tpu.memory_space<vmem>>, %arg3: memref<32x64xf32, #tpu.memory_space<vmem>>, %arg4: memref<64x64xf32, #tpu.memory_space<vmem>>, %arg5: memref<64x128xf32, #tpu.memory_space<vmem>>, %arg6: memref<32x128xf32, #tpu.memory_space<vmem>>, %arg7: memref<128x128xf32, #tpu.memory_space<vmem>>, %arg8: memref<128x4xf32, #tpu.memory_space<vmem>>, %arg9: memref<4x128xf32, #tpu.memory_space<vmem>>, %arg10: memref<32x4xf32, #tpu.memory_space<vmem>>) attributes {dimension_semantics = [#tpu.dimension_semantics<arbitrary>], iteration_bounds = array<i64: 1>, scalar_prefetch = 0 : i64, scratch_operands = 0 : i64, tpu.core_type = #tpu.core_type<tc>, window_params = [{pipeline_mode = #tpu.pipeline_mode<synchronous>, transform_indices = @transform_0, window_bounds = array<i64: 32, 32>}, {pipeline_mode = #tpu.pipeline_mode<synchronous>, transform_indices = @transform_1, window_bounds = array<i64: 32, 32>}, {pipeline_mode = #tpu.pipeline_mode<synchronous>, transform_indices = @transform_2, window_bounds = array<i64: 32, 64>}, {pipeline_mode = #tpu.pipeline_mode<synchronous>, transform_indices = @transform_3, window_bounds = array<i64: 64, 64>}, {pipeline_mode = #tpu.pipeline_mode<synchronous>, transform_indices = @transform_4, window_bounds = array<i64: 64, 128>}, {pipeline_mode = #tpu.pipeline_mode<synchronous>, transform_indices = @transform_5, window_bounds = array<i64: 32, 128>}, {pipeline_mode = #tpu.pipeline_mode<synchronous>, transform_indices = @transform_6, window_bounds = array<i64: 128, 128>}, {pipeline_mode = #tpu.pipeline_mode<synchronous>, transform_indices = @transform_7, window_bounds = array<i64: 128, 4>}, {pipeline_mode = #tpu.pipeline_mode<synchronous>, transform_indices = @transform_8, window_bounds = array<i64: 4, 128>}, {pipeline_mode = #tpu.pipeline_mode<synchronous>, transform_indices = @transform_9, window_bounds = array<i64: 32, 4>}]} {
    %c0 = arith.constant 0 : index
    %c0_0 = arith.constant 0 : index
    %0 = vector.load %arg1[%c0, %c0_0] : memref<32x32xf32, #tpu.memory_space<vmem>>, vector<32x32xf32>
    %c0_1 = arith.constant 0 : index
    %c0_2 = arith.constant 0 : index
    %1 = vector.load %arg2[%c0_1, %c0_2] : memref<32x32xf32, #tpu.memory_space<vmem>>, vector<32x32xf32>
    %c0_3 = arith.constant 0 : index
    %c0_4 = arith.constant 0 : index
    %2 = vector.load %arg3[%c0_3, %c0_4] : memref<32x64xf32, #tpu.memory_space<vmem>>, vector<32x64xf32>
    %cst = arith.constant dense<0.000000e+00> : vector<32x64xf32>
    %3 = tpu.matmul %0, %2, %cst {dimension_numbers = #tpu.dot_dimension_numbers<[1], [0], [0], [1], [0, 0, 1, 1], [], []>} : vector<32x32xf32>, vector<32x64xf32>, vector<32x64xf32> -> vector<32x64xf32>
    %cst_5 = arith.constant dense<0.000000e+00> : vector<32x64xf32>
    %4 = tpu.matmul %1, %3, %cst_5 {dimension_numbers = #tpu.dot_dimension_numbers<[1], [0], [0], [1], [0, 0, 1, 1], [], []>} : vector<32x32xf32>, vector<32x64xf32>, vector<32x64xf32> -> vector<32x64xf32>
    %cst_6 = arith.constant 0.000000e+00 : f32
    %5 = vector.broadcast %cst_6 : f32 to vector<32x64xf32>
    %6 = arith.maximumf %4, %5 : vector<32x64xf32>
    %c0_7 = arith.constant 0 : index
    %c0_8 = arith.constant 0 : index
    %7 = vector.load %arg4[%c0_7, %c0_8] : memref<64x64xf32, #tpu.memory_space<vmem>>, vector<64x64xf32>
    %cst_9 = arith.constant dense<0.000000e+00> : vector<32x64xf32>
    %8 = tpu.matmul %6, %7, %cst_9 {dimension_numbers = #tpu.dot_dimension_numbers<[1], [0], [0], [1], [0, 0, 1, 1], [], []>} : vector<32x64xf32>, vector<64x64xf32>, vector<32x64xf32> -> vector<32x64xf32>
    %cst_10 = arith.constant dense<0.000000e+00> : vector<32x64xf32>
    %9 = tpu.matmul %1, %8, %cst_10 {dimension_numbers = #tpu.dot_dimension_numbers<[1], [0], [0], [1], [0, 0, 1, 1], [], []>} : vector<32x32xf32>, vector<32x64xf32>, vector<32x64xf32> -> vector<32x64xf32>
    %cst_11 = arith.constant 0.000000e+00 : f32
    %10 = vector.broadcast %cst_11 : f32 to vector<32x64xf32>
    %11 = arith.maximumf %9, %10 : vector<32x64xf32>
    %c0_12 = arith.constant 0 : index
    %c0_13 = arith.constant 0 : index
    %12 = vector.load %arg9[%c0_12, %c0_13] : memref<4x128xf32, #tpu.memory_space<vmem>>, vector<4x128xf32>
    %c0_14 = arith.constant 0 : index
    %c0_15 = arith.constant 0 : index
    %13 = vector.load %arg5[%c0_14, %c0_15] : memref<64x128xf32, #tpu.memory_space<vmem>>, vector<64x128xf32>
    %cst_16 = arith.constant dense<0.000000e+00> : vector<32x128xf32>
    %14 = tpu.matmul %11, %13, %cst_16 {dimension_numbers = #tpu.dot_dimension_numbers<[1], [0], [0], [1], [0, 0, 1, 1], [], []>} : vector<32x64xf32>, vector<64x128xf32>, vector<32x128xf32> -> vector<32x128xf32>
    %c0_17 = arith.constant 0 : index
    %c0_18 = arith.constant 0 : index
    %15 = vector.load %arg6[%c0_17, %c0_18] : memref<32x128xf32, #tpu.memory_space<vmem>>, vector<32x128xf32>
    %cst_19 = arith.constant dense<0.000000e+00> : vector<32x128xf32>
    %16 = tpu.matmul %0, %15, %cst_19 {dimension_numbers = #tpu.dot_dimension_numbers<[1], [0], [0], [1], [0, 0, 1, 1], [], []>} : vector<32x32xf32>, vector<32x128xf32>, vector<32x128xf32> -> vector<32x128xf32>
    %17 = arith.addf %14, %16 : vector<32x128xf32>
    %18 = vector.extract_strided_slice %12 {offsets = [0, 0], sizes = [1, 128], strides = [1, 1]} : vector<4x128xf32> to vector<1x128xf32>
    %19 = vector.broadcast %18 : vector<1x128xf32> to vector<32x128xf32>
    %20 = arith.addf %17, %19 : vector<32x128xf32>
    %cst_20 = arith.constant 0.000000e+00 : f32
    %21 = vector.broadcast %cst_20 : f32 to vector<32x128xf32>
    %22 = arith.maximumf %20, %21 : vector<32x128xf32>
    %c0_21 = arith.constant 0 : index
    %c0_22 = arith.constant 0 : index
    %23 = vector.load %arg7[%c0_21, %c0_22] : memref<128x128xf32, #tpu.memory_space<vmem>>, vector<128x128xf32>
    %cst_23 = arith.constant dense<0.000000e+00> : vector<32x128xf32>
    %24 = tpu.matmul %22, %23, %cst_23 {dimension_numbers = #tpu.dot_dimension_numbers<[1], [0], [0], [1], [0, 0, 1, 1], [], []>} : vector<32x128xf32>, vector<128x128xf32>, vector<32x128xf32> -> vector<32x128xf32>
    %25 = arith.mulf %22, %22 : vector<32x128xf32>
    %c0_24 = arith.constant 0 : index
    %c0_25 = arith.constant 0 : index
    %26 = vector.load %arg7[%c0_24, %c0_25] : memref<128x128xf32, #tpu.memory_space<vmem>>, vector<128x128xf32>
    %cst_26 = arith.constant dense<0.000000e+00> : vector<32x128xf32>
    %27 = tpu.matmul %25, %26, %cst_26 {dimension_numbers = #tpu.dot_dimension_numbers<[1], [0], [0], [1], [0, 0, 1, 1], [], []>} : vector<32x128xf32>, vector<128x128xf32>, vector<32x128xf32> -> vector<32x128xf32>
    %28 = arith.mulf %24, %24 : vector<32x128xf32>
    %29 = arith.subf %27, %28 : vector<32x128xf32>
    %30 = arith.subf %22, %24 : vector<32x128xf32>
    %cst_27 = arith.constant 9.99999974E-6 : f32
    %31 = vector.broadcast %cst_27 : f32 to vector<32x128xf32>
    %32 = arith.addf %29, %31 : vector<32x128xf32>
    %33 = math.rsqrt %32 : vector<32x128xf32>
    %34 = arith.mulf %30, %33 : vector<32x128xf32>
    %35 = vector.extract_strided_slice %12 {offsets = [1, 0], sizes = [1, 128], strides = [1, 1]} : vector<4x128xf32> to vector<1x128xf32>
    %36 = vector.broadcast %35 : vector<1x128xf32> to vector<32x128xf32>
    %37 = arith.mulf %34, %36 : vector<32x128xf32>
    %38 = vector.extract_strided_slice %12 {offsets = [2, 0], sizes = [1, 128], strides = [1, 1]} : vector<4x128xf32> to vector<1x128xf32>
    %39 = vector.broadcast %38 : vector<1x128xf32> to vector<32x128xf32>
    %40 = arith.addf %37, %39 : vector<32x128xf32>
    %c0_28 = arith.constant 0 : index
    %c0_29 = arith.constant 0 : index
    %41 = vector.load %arg8[%c0_28, %c0_29] : memref<128x4xf32, #tpu.memory_space<vmem>>, vector<128x4xf32>
    %cst_30 = arith.constant dense<0.000000e+00> : vector<32x4xf32>
    %42 = tpu.matmul %40, %41, %cst_30 {dimension_numbers = #tpu.dot_dimension_numbers<[1], [0], [0], [1], [0, 0, 1, 1], [], []>} : vector<32x128xf32>, vector<128x4xf32>, vector<32x4xf32> -> vector<32x4xf32>
    %43 = vector.extract_strided_slice %12 {offsets = [3, 0], sizes = [1, 4], strides = [1, 1]} : vector<4x128xf32> to vector<1x4xf32>
    %44 = vector.broadcast %43 : vector<1x4xf32> to vector<32x4xf32>
    %45 = arith.addf %42, %44 : vector<32x4xf32>
    %c0_31 = arith.constant 0 : index
    %c0_32 = arith.constant 0 : index
    %46 = vector.load %arg10[%c0_31, %c0_32] : memref<32x4xf32, #tpu.memory_space<vmem>>, vector<32x4xf32>
    tpu.vector_store %arg10[%c0_31, %c0_32], %45 {strides = array<i32>} : memref<32x4xf32, #tpu.memory_space<vmem>>, vector<32x4xf32>,
    return
  }
  func.func @transform_0(%arg0: i32) -> (i32, i32) {
    %c0_i32 = arith.constant 0 : i32
    %c0_i32_0 = arith.constant 0 : i32
    %c0_i32_1 = arith.constant 0 : i32
    return %c0_i32, %c0_i32_0 : i32, i32
  }
  func.func @transform_1(%arg0: i32) -> (i32, i32) {
    %c0_i32 = arith.constant 0 : i32
    %c0_i32_0 = arith.constant 0 : i32
    %c0_i32_1 = arith.constant 0 : i32
    return %c0_i32, %c0_i32_0 : i32, i32
  }
  func.func @transform_2(%arg0: i32) -> (i32, i32) {
    %c0_i32 = arith.constant 0 : i32
    %c0_i32_0 = arith.constant 0 : i32
    %c0_i32_1 = arith.constant 0 : i32
    return %c0_i32, %c0_i32_0 : i32, i32
  }
  func.func @transform_3(%arg0: i32) -> (i32, i32) {
    %c0_i32 = arith.constant 0 : i32
    %c0_i32_0 = arith.constant 0 : i32
    %c0_i32_1 = arith.constant 0 : i32
    return %c0_i32, %c0_i32_0 : i32, i32
  }
  func.func @transform_4(%arg0: i32) -> (i32, i32) {
    %c0_i32 = arith.constant 0 : i32
    %c0_i32_0 = arith.constant 0 : i32
    %c0_i32_1 = arith.constant 0 : i32
    return %c0_i32, %c0_i32_0 : i32, i32
  }
  func.func @transform_5(%arg0: i32) -> (i32, i32) {
    %c0_i32 = arith.constant 0 : i32
    %c0_i32_0 = arith.constant 0 : i32
    %c0_i32_1 = arith.constant 0 : i32
    return %c0_i32, %c0_i32_0 : i32, i32
  }
  func.func @transform_6(%arg0: i32) -> (i32, i32) {
    %c0_i32 = arith.constant 0 : i32
    %c0_i32_0 = arith.constant 0 : i32
    %c0_i32_1 = arith.constant 0 : i32
    return %c0_i32, %c0_i32_0 : i32, i32
  }
  func.func @transform_7(%arg0: i32) -> (i32, i32) {
    %c0_i32 = arith.constant 0 : i32
    %c0_i32_0 = arith.constant 0 : i32
    %c0_i32_1 = arith.constant 0 : i32
    return %c0_i32, %c0_i32_0 : i32, i32
  }
  func.func @transform_8(%arg0: i32) -> (i32, i32) {
    %c0_i32 = arith.constant 0 : i32
    %c0_i32_0 = arith.constant 0 : i32
    %c0_i32_1 = arith.constant 0 : i32
    return %c0_i32, %c0_i32_0 : i32, i32
  }
  func.func @transform_9(%arg0: i32) -> (i32, i32) {
    %c0_i32 = arith.constant 0 : i32
    %c0_i32_0 = arith.constant 0 : i32
    %c0_i32_1 = arith.constant 0 : i32
    return %c0_i32, %c0_i32_0 : i32, i32
  }
}

</mosaic_0001>

<llo_original>
// kernel: tile.18
$region0: #{tile.18}
  #allocation0 [shape = 's32[1]{0}', space=sflag, size = 0x4, scoped, tag = 'scoped memory for tile.18']
  %s0 = inlined_call_operand.vmem [shape: f32[16], index: 0, kind: input, shape index: {}]
  %s1 = inlined_call_operand.vmem [shape: f32[8,16], index: 1, kind: output, shape index: {}]
  // Predicated region
  $region2: #{tile.18} parent=0 // pred_check
    _
  $region3: #{tile.18} parent=0 // pred_check_branch
    %3 = sbr.rel (0) target = $region5
  $region4: #{tile.18} parent=0 // pred_region
    _
  $region5: #{tile.18} parent=0 // pred_fallthru
    _
  %v4 = vld [vmem:[%s0] ss:$0 sm:$0xff]
  %5 = vst [vmem:[%s1] sm:$0xff] %v4

// kernel: tile.27
$region0: #{tile.27}
  %s0 = inlined_call_operand.vmem [shape: f32[8,16], index: 0, kind: input, shape index: {}]
  %s1 = inlined_call_operand.vmem [shape: f32[1,128], index: 1, kind: output, shape index: {}]
  $region1: #{tile.27} parent=0
    #allocation0 [shape = 'u8[4096]{0}', space=vmem, size = 0x1000, scoped, tag = 'scoped mem for output reshape']
    %v2 = vld [vmem:[%s0] sm:$0x1]
    %vm3 = vcmask 130048
    %4 = vst.msk [vmem:[#allocation0] sm:$0x1] %vm3, %v2
    %s5 = scalar_lea.vmem %s0, 7
    %v6 = vld [vmem:[%s5] sm:$0x1]
    %7 = vrot.lane.b32.xlu0 %v6, 112
    %v8 = vpop.permute.xlu0 %7
    %vm9 = vcmask 1048448
    %10 = vst.msk [vmem:[#allocation0] sm:$0x1] %vm9, %v8
    %s11 = scalar_lea.vmem %s0, 6
    %v12 = vld [vmem:[%s11] sm:$0x1]
    %13 = vrot.lane.b32.xlu0 %v12, 96
    %v14 = vpop.permute.xlu0 %13
    %vm15 = vcmask 917248
    %16 = vst.msk [vmem:[#allocation0] sm:$0x1] %vm15, %v14
    %s17 = scalar_lea.vmem %s0, 5
    %v18 = vld [vmem:[%s17] sm:$0x1]
    %19 = vrot.lane.b32.xlu0 %v18, 80
    %v20 = vpop.permute.xlu0 %19
    %vm21 = vcmask 786048
    %22 = vst.msk [vmem:[#allocation0] sm:$0x1] %vm21, %v20
    %s23 = scalar_lea.vmem %s0, 4
    %v24 = vld [vmem:[%s23] sm:$0x1]
    %25 = vrot.lane.b32.xlu0 %v24, 64
    %v26 = vpop.permute.xlu0 %25
    %vm27 = vcmask 654848
    %28 = vst.msk [vmem:[#allocation0] sm:$0x1] %vm27, %v26
    %s29 = scalar_lea.vmem %s0, 3
    %v30 = vld [vmem:[%s29] sm:$0x1]
    %31 = vrot.lane.b32.xlu0 %v30, 48
    %v32 = vpop.permute.xlu0 %31
    %vm33 = vcmask 523648
    %34 = vst.msk [vmem:[#allocation0] sm:$0x1] %vm33, %v32
    %s35 = scalar_lea.vmem %s0, 2
    %v36 = vld [vmem:[%s35] sm:$0x1]
    %37 = vrot.lane.b32.xlu0 %v36, 32
    %v38 = vpop.permute.xlu0 %37
    %vm39 = vcmask 392448
    %40 = vst.msk [vmem:[#allocation0] sm:$0x1] %vm39, %v38
    %s41 = scalar_lea.vmem %s0, 1
    %v42 = vld [vmem:[%s41] sm:$0x1]
    %43 = vrot.lane.b32.xlu0 %v42, 16
    %v44 = vpop.permute.xlu0 %43
    %vm45 = vcmask 261248
    %46 = vst.msk [vmem:[#allocation0] sm:$0x1] %vm45, %v44
    %s48 = sshllo.u32 0, 1
    %v50 = vld [vmem:[#allocation0] sm:%s48]
    %s51 = sshllo.u32 0, 1
    %52 = vst [vmem:[%s1] sm:%s51] %v50

// kernel: mcstgcn_forward.1
$region0: #{mcstgcn_forward.1}
  #allocation0 [shape = 'u32[]', space=smem, size = 0x4, offset = 0x4, fixed_abs, tag = 'smem constant byte address 0x4 - core index']
  #allocation1 [shape = 'u32[144,128]{1,0:T(1,128)}', space=vmem, size = 0x12000, scoped, tag = 'internal scratch']
  %s0 = inlined_call_operand.vmem [shape: f32[32,32], index: 0, kind: input, shape index: {}]
  %s1 = inlined_call_operand.vmem [shape: f32[32,32], index: 1, kind: input, shape index: {}]
  %s2 = inlined_call_operand.vmem [shape: f32[32,64], index: 2, kind: input, shape index: {}]
  %s3 = inlined_call_operand.vmem [shape: f32[64,64], index: 3, kind: input, shape index: {}]
  %s4 = inlined_call_operand.vmem [shape: f32[64,128], index: 4, kind: input, shape index: {}]
  %s5 = inlined_call_operand.vmem [shape: f32[32,128], index: 5, kind: input, shape index: {}]
  %s6 = inlined_call_operand.vmem [shape: f32[128,128], index: 6, kind: input, shape index: {}]
  %s7 = inlined_call_operand.vmem [shape: f32[128,4], index: 7, kind: input, shape index: {}]
  %s8 = inlined_call_operand.vmem [shape: f32[4,128], index: 8, kind: input, shape index: {}]
  %s9 = inlined_call_operand.vmem [shape: f32[32,4], index: 9, kind: output, shape index: {}]
  %s10 = sld [smem:[#allocation0]]
  $region46: #{mcstgcn_forward.1} parent=0
    _
  %s12 = ssub.s32 1, %s10
  %s13 = scalar_select 0, %s12, %s10
  // Predicated region
  $region2: #{mcstgcn_forward.1} parent=0 // pred_check
    _
  $region3: #{mcstgcn_forward.1} parent=0 // pred_check_branch
    %15 = sbr.rel (0) target = $region5
  $region4: #{mcstgcn_forward.1} parent=0 // pred_region
    _
  $region5: #{mcstgcn_forward.1} parent=0 // pred_fallthru
    _
  // Predicated region
  $region6: #{mcstgcn_forward.1} parent=0 // pred_check
    _
  $region7: #{mcstgcn_forward.1} parent=0 // pred_check_branch
    %17 = sbr.rel (0) target = $region9
  $region8: #{mcstgcn_forward.1} parent=0 // pred_region
    _
  $region9: #{mcstgcn_forward.1} parent=0 // pred_fallthru
    _
  // Predicated region
  $region10: #{mcstgcn_forward.1} parent=0 // pred_check
    _
  $region11: #{mcstgcn_forward.1} parent=0 // pred_check_branch
    %19 = sbr.rel (0) target = $region13
  $region12: #{mcstgcn_forward.1} parent=0 // pred_region
    _
  $region13: #{mcstgcn_forward.1} parent=0 // pred_fallthru
    _
  // Predicated region
  $region14: #{mcstgcn_forward.1} parent=0 // pred_check
    _
  $region15: #{mcstgcn_forward.1} parent=0 // pred_check_branch
    %21 = sbr.rel (0) target = $region17
  $region16: #{mcstgcn_forward.1} parent=0 // pred_region
    _
  $region17: #{mcstgcn_forward.1} parent=0 // pred_fallthru
    _
  // Predicated region
  $region18: #{mcstgcn_forward.1} parent=0 // pred_check
    _
  $region19: #{mcstgcn_forward.1} parent=0 // pred_check_branch
    %23 = sbr.rel (0) target = $region21
  $region20: #{mcstgcn_forward.1} parent=0 // pred_region
    _
  $region21: #{mcstgcn_forward.1} parent=0 // pred_fallthru
    _
  // Predicated region
  $region22: #{mcstgcn_forward.1} parent=0 // pred_check
    _
  $region23: #{mcstgcn_forward.1} parent=0 // pred_check_branch
    %25 = sbr.rel (0) target = $region25
  $region24: #{mcstgcn_forward.1} parent=0 // pred_region
    _
  $region25: #{mcstgcn_forward.1} parent=0 // pred_fallthru
    _
  // Predicated region
  $region26: #{mcstgcn_forward.1} parent=0 // pred_check
    _
  $region27: #{mcstgcn_forward.1} parent=0 // pred_check_branch
    %27 = sbr.rel (0) target = $region29
  $region28: #{mcstgcn_forward.1} parent=0 // pred_region
    _
  $region29: #{mcstgcn_forward.1} parent=0 // pred_fallthru
    _
  // Predicated region
  $region30: #{mcstgcn_forward.1} parent=0 // pred_check
    _
  $region31: #{mcstgcn_forward.1} parent=0 // pred_check_branch
    %29 = sbr.rel (0) target = $region33
  $region32: #{mcstgcn_forward.1} parent=0 // pred_region
    _
  $region33: #{mcstgcn_forward.1} parent=0 // pred_fallthru
    _
  // Predicated region
  $region34: #{mcstgcn_forward.1} parent=0 // pred_check
    _
  $region35: #{mcstgcn_forward.1} parent=0 // pred_check_branch
    %31 = sbr.rel (0) target = $region37
  $region36: #{mcstgcn_forward.1} parent=0 // pred_region
    _
  $region37: #{mcstgcn_forward.1} parent=0 // pred_fallthru
    _
  %v32 = vld [vmem:[%s0] sm:$0xff]
  %v33 = vld [vmem:[%s0 + $0x8] sm:$0xff]
  %v34 = vld [vmem:[%s0 + $0x10] sm:$0xff]
  %v35 = vld [vmem:[%s0 + $0x18] sm:$0xff]
  %v36 = vld [vmem:[%s1] sm:$0xff]
  %v37 = vld [vmem:[%s1 + $0x8] sm:$0xff]
  %v38 = vld [vmem:[%s1 + $0x10] sm:$0xff]
  %v39 = vld [vmem:[%s1 + $0x18] sm:$0xff]
  %v40 = vld [vmem:[%s2] sm:$0xff]
  %v41 = vld [vmem:[%s2 + $0x8] sm:$0xff]
  %v42 = vld [vmem:[%s2 + $0x10] sm:$0xff]
  %v43 = vld [vmem:[%s2 + $0x18] sm:$0xff]
  %vm44 = vcmask 261120
  %v46 = vsel %vm44, %v32, 0
  %v49 = vsel %vm44, %v33, 0
  %v52 = vsel %vm44, %v34, 0
  %v55 = vsel %vm44, %v35, 0
  %57 = vmatprep.subr.mxu0 0.0
  %58 = vmatpush1.msra.mxu0 %v40
  %59 = vmatprep.subr.mxu0 0.0
  %60 = vmatpush1.msra.mxu0 %v41
  %61 = vmatprep.subr.mxu0 0.0
  %62 = vmatpush1.msra.mxu0 %v42
  %63 = vmatprep.subr.mxu0 0.0
  %64 = vmatpush1.msra.mxu0 %v43
  %65 = vmatprep.subr.mxu0 0.0
  %66 = vmatpush1.msra.mxu0 0.0
  %67 = vmatprep.subr.mxu0 0.0
  %68 = vmatpush1.msra.mxu0 0.0
  %69 = vmatprep.subr.mxu0 0.0
  %70 = vmatpush1.msra.mxu0 0.0
  %71 = vmatprep.subr.mxu0 0.0
  %72 = vmatpush1.msra.mxu0 0.0
  %73 = vmatprep.subr.mxu0 0.0
  %74 = vmatpush1.msra.mxu0 0.0
  %75 = vmatprep.subr.mxu0 0.0
  %76 = vmatpush1.msra.mxu0 0.0
  %77 = vmatprep.subr.mxu0 0.0
  %78 = vmatpush1.msra.mxu0 0.0
  %79 = vmatprep.subr.mxu0 0.0
  %80 = vmatpush1.msra.mxu0 0.0
  %81 = vmatprep.subr.mxu0 0.0
  %82 = vmatpush1.msra.mxu0 0.0
  %83 = vmatprep.subr.mxu0 0.0
  %84 = vmatpush1.msra.mxu0 0.0
  %85 = vmatprep.subr.mxu0 0.0
  %86 = vmatpush1.msra.mxu0 0.0
  %87 = vmatprep.subr.mxu0 0.0
  %88 = vmatpush1.msra.mxu0 0.0
  %89 = vmatprep.subr.mxu0 0.0
  %90 = vmatpush1.msra.mxu0 0.0
  %91 = vmatprep.subr.mxu0 0.0
  %92 = vmatpush1.msra.mxu0 0.0
  %93 = vmatprep.subr.mxu0 0.0
  %94 = vmatpush1.msra.mxu0 0.0
  %95 = vmatprep.subr.mxu0 0.0
  %96 = vmatpush1.msra.mxu0 0.0
  %97 = vmatprep.subr.mxu0 0.0
  %98 = vmatpush1.msra.mxu0 0.0
  %99 = vmatprep.subr.mxu0 0.0
  %100 = vmatpush1.msra.mxu0 0.0
  %101 = vmatprep.subr.mxu0 0.0
  %102 = vmatpush1.msra.mxu0 0.0
  %103 = vmatprep.subr.mxu0 0.0
  %104 = vmatpush1.msra.mxu0 0.0
  %105 = vmatprep.subr.mxu0 0.0
  %106 = vmatpush1.msra.mxu0 0.0
  %107 = vmatprep.subr.mxu0 0.0
  %108 = vmatpush1.msra.mxu0 0.0
  %109 = vmatprep.subr.mxu0 0.0
  %110 = vmatpush1.msra.mxu0 0.0
  %111 = vmatprep.subr.mxu0 0.0
  %112 = vmatpush1.msra.mxu0 0.0
  %113 = vmatprep.subr.mxu0 0.0
  %114 = vmatpush1.msra.mxu0 0.0
  %115 = vmatprep.subr.mxu0 0.0
  %116 = vmatpush1.msra.mxu0 0.0
  %117 = vmatprep.subr.mxu0 0.0
  %118 = vmatpush1.msra.mxu0 0.0
  %119 = vmatprep.subr.mxu0 0.0
  %120 = vmatpush1.msra.mxu0 0.0
  %121 = vmatprep.mubr.f32.mxu0 0.0
  %122 = vmatmul.mubr.f32.gmra.mrb[0].mxu0 %v46
  %v123 = vpop.f32.mrb[0].mxu0
  %v124 = vadd.f32 0.0, %v123
  %v125 = vpop.f32.mrb[0].mxu0
  %126 = vmatprep.mubr.f32.mxu0 0.0
  %127 = vmatmul.mubr.f32.gmra.mrb[0].mxu0 %v49
  %v128 = vpop.f32.mrb[0].mxu0
  %v129 = vadd.f32 0.0, %v128
  %v130 = vpop.f32.mrb[0].mxu0
  %131 = vmatprep.mubr.f32.mxu0 0.0
  %132 = vmatmul.mubr.f32.gmra.mrb[0].mxu0 %v52
  %v133 = vpop.f32.mrb[0].mxu0
  %v134 = vadd.f32 0.0, %v133
  %v135 = vpop.f32.mrb[0].mxu0
  %136 = vmatprep.mubr.f32.mxu0 0.0
  %137 = vmatmul.mubr.f32.gmra.mrb[0].mxu0 %v55
  %v138 = vpop.f32.mrb[0].mxu0
  %v139 = vadd.f32 0.0, %v138
  %v140 = vpop.f32.mrb[0].mxu0
  %141 = vdwg.mxu0
  %v143 = vsel %vm44, %v36, 0
  %v146 = vsel %vm44, %v37, 0
  %v149 = vsel %vm44, %v38, 0
  %v152 = vsel %vm44, %v39, 0
  %154 = vmatprep.subr.mxu0 0.0
  %155 = vmatpush1.msra.mxu0 %v124
  %156 = vmatprep.subr.mxu0 0.0
  %157 = vmatpush1.msra.mxu0 %v129
  %158 = vmatprep.subr.mxu0 0.0
  %159 = vmatpush1.msra.mxu0 %v134
  %160 = vmatprep.subr.mxu0 0.0
  %161 = vmatpush1.msra.mxu0 %v139
  %162 = vmatprep.subr.mxu0 0.0
  %163 = vmatpush1.msra.mxu0 0.0
  %164 = vmatprep.subr.mxu0 0.0
  %165 = vmatpush1.msra.mxu0 0.0
  %166 = vmatprep.subr.mxu0 0.0
  %167 = vmatpush1.msra.mxu0 0.0
  %168 = vmatprep.subr.mxu0 0.0
  %169 = vmatpush1.msra.mxu0 0.0
  %170 = vmatprep.subr.mxu0 0.0
  %171 = vmatpush1.msra.mxu0 0.0
  %172 = vmatprep.subr.mxu0 0.0
  %173 = vmatpush1.msra.mxu0 0.0
  %174 = vmatprep.subr.mxu0 0.0
  %175 = vmatpush1.msra.mxu0 0.0
  %176 = vmatprep.subr.mxu0 0.0
  %177 = vmatpush1.msra.mxu0 0.0
  %178 = vmatprep.subr.mxu0 0.0
  %179 = vmatpush1.msra.mxu0 0.0
  %180 = vmatprep.subr.mxu0 0.0
  %181 = vmatpush1.msra.mxu0 0.0
  %182 = vmatprep.subr.mxu0 0.0
  %183 = vmatpush1.msra.mxu0 0.0
  %184 = vmatprep.subr.mxu0 0.0
  %185 = vmatpush1.msra.mxu0 0.0
  %186 = vmatprep.subr.mxu0 0.0
  %187 = vmatpush1.msra.mxu0 0.0
  %188 = vmatprep.subr.mxu0 0.0
  %189 = vmatpush1.msra.mxu0 0.0
  %190 = vmatprep.subr.mxu0 0.0
  %191 = vmatpush1.msra.mxu0 0.0
  %192 = vmatprep.subr.mxu0 0.0
  %193 = vmatpush1.msra.mxu0 0.0
  %194 = vmatprep.subr.mxu0 0.0
  %195 = vmatpush1.msra.mxu0 0.0
  %196 = vmatprep.subr.mxu0 0.0
  %197 = vmatpush1.msra.mxu0 0.0
  %198 = vmatprep.subr.mxu0 0.0
  %199 = vmatpush1.msra.mxu0 0.0
  %200 = vmatprep.subr.mxu0 0.0
  %201 = vmatpush1.msra.mxu0 0.0
  %202 = vmatprep.subr.mxu0 0.0
  %203 = vmatpush1.msra.mxu0 0.0
  %204 = vmatprep.subr.mxu0 0.0
  %205 = vmatpush1.msra.mxu0 0.0
  %206 = vmatprep.subr.mxu0 0.0
  %207 = vmatpush1.msra.mxu0 0.0
  %208 = vmatprep.subr.mxu0 0.0
  %209 = vmatpush1.msra.mxu0 0.0
  %210 = vmatprep.subr.mxu0 0.0
  %211 = vmatpush1.msra.mxu0 0.0
  %212 = vmatprep.subr.mxu0 0.0
  %213 = vmatpush1.msra.mxu0 0.0
  %214 = vmatprep.subr.mxu0 0.0
  %215 = vmatpush1.msra.mxu0 0.0
  %216 = vmatprep.subr.mxu0 0.0
  %217 = vmatpush1.msra.mxu0 0.0
  %218 = vmatprep.mubr.f32.mxu0 0.0
  %219 = vmatmul.mubr.f32.gmra.mrb[0].mxu0 %v143
  %v220 = vpop.f32.mrb[0].mxu0
  %v221 = vadd.f32 0.0, %v220
  %v222 = vpop.f32.mrb[0].mxu0
  %223 = vmatprep.mubr.f32.mxu0 0.0
  %224 = vmatmul.mubr.f32.gmra.mrb[0].mxu0 %v146
  %v225 = vpop.f32.mrb[0].mxu0
  %v226 = vadd.f32 0.0, %v225
  %v227 = vpop.f32.mrb[0].mxu0
  %228 = vmatprep.mubr.f32.mxu0 0.0
  %229 = vmatmul.mubr.f32.gmra.mrb[0].mxu0 %v149
  %v230 = vpop.f32.mrb[0].mxu0
  %v231 = vadd.f32 0.0, %v230
  %v232 = vpop.f32.mrb[0].mxu0
  %233 = vmatprep.mubr.f32.mxu0 0.0
  %234 = vmatmul.mubr.f32.gmra.mrb[0].mxu0 %v152
  %v235 = vpop.f32.mrb[0].mxu0
  %v236 = vadd.f32 0.0, %v235
  %v237 = vpop.f32.mrb[0].mxu0
  %238 = vdwg.mxu0
  %v239 = vmax.f32 %v221, 0.0
  %v240 = vmax.f32 %v226, 0.0
  %v241 = vmax.f32 %v231, 0.0
  %v242 = vmax.f32 %v236, 0.0
  %v243 = vld [vmem:[%s3] sm:$0xff]
  %v244 = vld [vmem:[%s3 + $0x8] sm:$0xff]
  %v245 = vld [vmem:[%s3 + $0x10] sm:$0xff]
  %v246 = vld [vmem:[%s3 + $0x18] sm:$0xff]
  %v247 = vld [vmem:[%s3 + $0x20] sm:$0xff]
  %v248 = vld [vmem:[%s3 + $0x28] sm:$0xff]
  %v249 = vld [vmem:[%s3 + $0x30] sm:$0xff]
  %v250 = vld [vmem:[%s3 + $0x38] sm:$0xff]
  %vm251 = vcmask 523264
  %v253 = vsel %vm251, %v239, 0
  %v256 = vsel %vm251, %v240, 0
  %v259 = vsel %vm251, %v241, 0
  %v262 = vsel %vm251, %v242, 0
  %264 = vmatprep.subr.mxu0 0.0
  %265 = vmatpush1.msra.mxu0 %v243
  %266 = vmatprep.subr.mxu0 0.0
  %267 = vmatpush1.msra.mxu0 %v244
  %268 = vmatprep.subr.mxu0 0.0
  %269 = vmatpush1.msra.mxu0 %v245
  %270 = vmatprep.subr.mxu0 0.0
  %271 = vmatpush1.msra.mxu0 %v246
  %272 = vmatprep.subr.mxu0 0.0
  %273 = vmatpush1.msra.mxu0 %v247
  %274 = vmatprep.subr.mxu0 0.0
  %275 = vmatpush1.msra.mxu0 %v248
  %276 = vmatprep.subr.mxu0 0.0
  %277 = vmatpush1.msra.mxu0 %v249
  %278 = vmatprep.subr.mxu0 0.0
  %279 = vmatpush1.msra.mxu0 %v250
  %280 = vmatprep.subr.mxu0 0.0
  %281 = vmatpush1.msra.mxu0 0.0
  %282 = vmatprep.subr.mxu0 0.0
  %283 = vmatpush1.msra.mxu0 0.0
  %284 = vmatprep.subr.mxu0 0.0
  %285 = vmatpush1.msra.mxu0 0.0
  %286 = vmatprep.subr.mxu0 0.0
  %287 = vmatpush1.msra.mxu0 0.0
  %288 = vmatprep.subr.mxu0 0.0
  %289 = vmatpush1.msra.mxu0 0.0
  %290 = vmatprep.subr.mxu0 0.0
  %291 = vmatpush1.msra.mxu0 0.0
  %292 = vmatprep.subr.mxu0 0.0
  %293 = vmatpush1.msra.mxu0 0.0
  %294 = vmatprep.subr.mxu0 0.0
  %295 = vmatpush1.msra.mxu0 0.0
  %296 = vmatprep.subr.mxu0 0.0
  %297 = vmatpush1.msra.mxu0 0.0
  %298 = vmatprep.subr.mxu0 0.0
  %299 = vmatpush1.msra.mxu0 0.0
  %300 = vmatprep.subr.mxu0 0.0
  %301 = vmatpush1.msra.mxu0 0.0
  %302 = vmatprep.subr.mxu0 0.0
  %303 = vmatpush1.msra.mxu0 0.0
  %304 = vmatprep.subr.mxu0 0.0
  %305 = vmatpush1.msra.mxu0 0.0
  %306 = vmatprep.subr.mxu0 0.0
  %307 = vmatpush1.msra.mxu0 0.0
  %308 = vmatprep.subr.mxu0 0.0
  %309 = vmatpush1.msra.mxu0 0.0
  %310 = vmatprep.subr.mxu0 0.0
  %311 = vmatpush1.msra.mxu0 0.0
  %312 = vmatprep.subr.mxu0 0.0
  %313 = vmatpush1.msra.mxu0 0.0
  %314 = vmatprep.subr.mxu0 0.0
  %315 = vmatpush1.msra.mxu0 0.0
  %316 = vmatprep.subr.mxu0 0.0
  %317 = vmatpush1.msra.mxu0 0.0
  %318 = vmatprep.subr.mxu0 0.0
  %319 = vmatpush1.msra.mxu0 0.0
  %320 = vmatprep.subr.mxu0 0.0
  %321 = vmatpush1.msra.mxu0 0.0
  %322 = vmatprep.subr.mxu0 0.0
  %323 = vmatpush1.msra.mxu0 0.0
  %324 = vmatprep.subr.mxu0 0.0
  %325 = vmatpush1.msra.mxu0 0.0
  %326 = vmatprep.subr.mxu0 0.0
  %327 = vmatpush1.msra.mxu0 0.0
  %328 = vmatprep.mubr.f32.mxu0 0.0
  %329 = vmatmul.mubr.f32.gmra.mrb[0].mxu0 %v253
  %v330 = vpop.f32.mrb[0].mxu0
  %v331 = vadd.f32 0.0, %v330
  %v332 = vpop.f32.mrb[0].mxu0
  %333 = vmatprep.mubr.f32.mxu0 0.0
  %334 = vmatmul.mubr.f32.gmra.mrb[0].mxu0 %v256
  %v335 = vpop.f32.mrb[0].mxu0
  %v336 = vadd.f32 0.0, %v335
  %v337 = vpop.f32.mrb[0].mxu0
  %338 = vmatprep.mubr.f32.mxu0 0.0
  %339 = vmatmul.mubr.f32.gmra.mrb[0].mxu0 %v259
  %v340 = vpop.f32.mrb[0].mxu0
  %v341 = vadd.f32 0.0, %v340
  %v342 = vpop.f32.mrb[0].mxu0
  %343 = vmatprep.mubr.f32.mxu0 0.0
  %344 = vmatmul.mubr.f32.gmra.mrb[0].mxu0 %v262
  %v345 = vpop.f32.mrb[0].mxu0
  %v346 = vadd.f32 0.0, %v345
  %v347 = vpop.f32.mrb[0].mxu0
  %348 = vdwg.mxu0
  %349 = vmatprep.subr.mxu0 0.0
  %350 = vmatpush1.msra.mxu0 %v331
  %351 = vmatprep.subr.mxu0 0.0
  %352 = vmatpush1.msra.mxu0 %v336
  %353 = vmatprep.subr.mxu0 0.0
  %354 = vmatpush1.msra.mxu0 %v341
  %355 = vmatprep.subr.mxu0 0.0
  %356 = vmatpush1.msra.mxu0 %v346
  %357 = vmatprep.subr.mxu0 0.0
  %358 = vmatpush1.msra.mxu0 0.0
  %359 = vmatprep.subr.mxu0 0.0
  %360 = vmatpush1.msra.mxu0 0.0
  %361 = vmatprep.subr.mxu0 0.0
  %362 = vmatpush1.msra.mxu0 0.0
  %363 = vmatprep.subr.mxu0 0.0
  %364 = vmatpush1.msra.mxu0 0.0
  %365 = vmatprep.subr.mxu0 0.0
  %366 = vmatpush1.msra.mxu0 0.0
  %367 = vmatprep.subr.mxu0 0.0
  %368 = vmatpush1.msra.mxu0 0.0
  %369 = vmatprep.subr.mxu0 0.0
  %370 = vmatpush1.msra.mxu0 0.0
  %371 = vmatprep.subr.mxu0 0.0
  %372 = vmatpush1.msra.mxu0 0.0
  %373 = vmatprep.subr.mxu0 0.0
  %374 = vmatpush1.msra.mxu0 0.0
  %375 = vmatprep.subr.mxu0 0.0
  %376 = vmatpush1.msra.mxu0 0.0
  %377 = vmatprep.subr.mxu0 0.0
  %378 = vmatpush1.msra.mxu0 0.0
  %379 = vmatprep.subr.mxu0 0.0
  %380 = vmatpush1.msra.mxu0 0.0
  %381 = vmatprep.subr.mxu0 0.0
  %382 = vmatpush1.msra.mxu0 0.0
  %383 = vmatprep.subr.mxu0 0.0
  %384 = vmatpush1.msra.mxu0 0.0
  %385 = vmatprep.subr.mxu0 0.0
  %386 = vmatpush1.msra.mxu0 0.0
  %387 = vmatprep.subr.mxu0 0.0
  %388 = vmatpush1.msra.mxu0 0.0
  %389 = vmatprep.subr.mxu0 0.0
  %390 = vmatpush1.msra.mxu0 0.0
  %391 = vmatprep.subr.mxu0 0.0
  %392 = vmatpush1.msra.mxu0 0.0
  %393 = vmatprep.subr.mxu0 0.0
  %394 = vmatpush1.msra.mxu0 0.0
  %395 = vmatprep.subr.mxu0 0.0
  %396 = vmatpush1.msra.mxu0 0.0
  %397 = vmatprep.subr.mxu0 0.0
  %398 = vmatpush1.msra.mxu0 0.0
  %399 = vmatprep.subr.mxu0 0.0
  %400 = vmatpush1.msra.mxu0 0.0
  %401 = vmatprep.subr.mxu0 0.0
  %402 = vmatpush1.msra.mxu0 0.0
  %403 = vmatprep.subr.mxu0 0.0
  %404 = vmatpush1.msra.mxu0 0.0
  %405 = vmatprep.subr.mxu0 0.0
  %406 = vmatpush1.msra.mxu0 0.0
  %407 = vmatprep.subr.mxu0 0.0
  %408 = vmatpush1.msra.mxu0 0.0
  %409 = vmatprep.subr.mxu0 0.0
  %410 = vmatpush1.msra.mxu0 0.0
  %411 = vmatprep.subr.mxu0 0.0
  %412 = vmatpush1.msra.mxu0 0.0
  %413 = vmatprep.mubr.f32.mxu0 0.0
  %414 = vmatmul.mubr.f32.gmra.mrb[0].mxu0 %v143
  %v415 = vpop.f32.mrb[0].mxu0
  %v416 = vadd.f32 0.0, %v415
  %v417 = vpop.f32.mrb[0].mxu0
  %418 = vmatprep.mubr.f32.mxu0 0.0
  %419 = vmatmul.mubr.f32.gmra.mrb[0].mxu0 %v146
  %v420 = vpop.f32.mrb[0].mxu0
  %v421 = vadd.f32 0.0, %v420
  %v422 = vpop.f32.mrb[0].mxu0
  %423 = vmatprep.mubr.f32.mxu0 0.0
  %424 = vmatmul.mubr.f32.gmra.mrb[0].mxu0 %v149
  %v425 = vpop.f32.mrb[0].mxu0
  %v426 = vadd.f32 0.0, %v425
  %v427 = vpop.f32.mrb[0].mxu0
  %428 = vmatprep.mubr.f32.mxu0 0.0
  %429 = vmatmul.mubr.f32.gmra.mrb[0].mxu0 %v152
  %v430 = vpop.f32.mrb[0].mxu0
  %v431 = vadd.f32 0.0, %v430
  %v432 = vpop.f32.mrb[0].mxu0
  %433 = vdwg.mxu0
  %v434 = vmax.f32 %v416, 0.0
  %v435 = vmax.f32 %v421, 0.0
  %v436 = vmax.f32 %v426, 0.0
  %v437 = vmax.f32 %v431, 0.0
  %v438 = vld [vmem:[%s8] sm:$0xf]
  %v439 = vld [vmem:[%s4] sm:$0xff]
  %v440 = vld [vmem:[%s4 + $0x8] sm:$0xff]
  %v441 = vld [vmem:[%s4 + $0x10] sm:$0xff]
  %v442 = vld [vmem:[%s4 + $0x18] sm:$0xff]
  %v443 = vld [vmem:[%s4 + $0x20] sm:$0xff]
  %v444 = vld [vmem:[%s4 + $0x28] sm:$0xff]
  %v445 = vld [vmem:[%s4 + $0x30] sm:$0xff]
  %v446 = vld [vmem:[%s4 + $0x38] sm:$0xff]
  %v447 = vld [vmem:[%s5] sm:$0xff]
  %v448 = vld [vmem:[%s5 + $0x8] sm:$0xff]
  %v449 = vld [vmem:[%s5 + $0x10] sm:$0xff]
  %v450 = vld [vmem:[%s5 + $0x18] sm:$0xff]
  %451 = vmatprep.subr.mxu0 0.0
  %452 = vmatpush1.msra.mxu0 %v447
  %453 = vmatprep.subr.mxu0 0.0
  %454 = vmatpush1.msra.mxu0 %v448
  %455 = vmatprep.subr.mxu0 0.0
  %456 = vmatpush1.msra.mxu0 %v449
  %457 = vmatprep.subr.mxu0 0.0
  %458 = vmatpush1.msra.mxu0 %v450
  %459 = vmatprep.subr.mxu0 0.0
  %460 = vmatpush1.msra.mxu0 0.0
  %461 = vmatprep.subr.mxu0 0.0
  %462 = vmatpush1.msra.mxu0 0.0
  %463 = vmatprep.subr.mxu0 0.0
  %464 = vmatpush1.msra.mxu0 0.0
  %465 = vmatprep.subr.mxu0 0.0
  %466 = vmatpush1.msra.mxu0 0.0
  %467 = vmatprep.subr.mxu0 0.0
  %468 = vmatpush1.msra.mxu0 0.0
  %469 = vmatprep.subr.mxu0 0.0
  %470 = vmatpush1.msra.mxu0 0.0
  %471 = vmatprep.subr.mxu0 0.0
  %472 = vmatpush1.msra.mxu0 0.0
  %473 = vmatprep.subr.mxu0 0.0
  %474 = vmatpush1.msra.mxu0 0.0
  %475 = vmatprep.subr.mxu0 0.0
  %476 = vmatpush1.msra.mxu0 0.0
  %477 = vmatprep.subr.mxu0 0.0
  %478 = vmatpush1.msra.mxu0 0.0
  %479 = vmatprep.subr.mxu0 0.0
  %480 = vmatpush1.msra.mxu0 0.0
  %481 = vmatprep.subr.mxu0 0.0
  %482 = vmatpush1.msra.mxu0 0.0
  %483 = vmatprep.subr.mxu0 0.0
  %484 = vmatpush1.msra.mxu0 0.0
  %485 = vmatprep.subr.mxu0 0.0
  %486 = vmatpush1.msra.mxu0 0.0
  %487 = vmatprep.subr.mxu0 0.0
  %488 = vmatpush1.msra.mxu0 0.0
  %489 = vmatprep.subr.mxu0 0.0
  %490 = vmatpush1.msra.mxu0 0.0
  %491 = vmatprep.subr.mxu0 0.0
  %492 = vmatpush1.msra.mxu0 0.0
  %493 = vmatprep.subr.mxu0 0.0
  %494 = vmatpush1.msra.mxu0 0.0
  %495 = vmatprep.subr.mxu0 0.0
  %496 = vmatpush1.msra.mxu0 0.0
  %497 = vmatprep.subr.mxu0 0.0
  %498 = vmatpush1.msra.mxu0 0.0
  %499 = vmatprep.subr.mxu0 0.0
  %500 = vmatpush1.msra.mxu0 0.0
  %501 = vmatprep.subr.mxu0 0.0
  %502 = vmatpush1.msra.mxu0 0.0
  %503 = vmatprep.subr.mxu0 0.0
  %504 = vmatpush1.msra.mxu0 0.0
  %505 = vmatprep.subr.mxu0 0.0
  %506 = vmatpush1.msra.mxu0 0.0
  %507 = vmatprep.subr.mxu0 0.0
  %508 = vmatpush1.msra.mxu0 0.0
  %509 = vmatprep.subr.mxu0 0.0
  %510 = vmatpush1.msra.mxu0 0.0
  %511 = vmatprep.subr.mxu0 0.0
  %512 = vmatpush1.msra.mxu0 0.0
  %513 = vmatprep.subr.mxu0 0.0
  %514 = vmatpush1.msra.mxu0 0.0
  %515 = vmatprep.mubr.f32.mxu0 0.0
  %516 = vmatmul.mubr.f32.gmra.mrb[0].mxu0 %v46
  %v517 = vpop.f32.mrb[0].mxu0
  %v518 = vadd.f32 0.0, %v517
  %v519 = vpop.f32.mrb[0].mxu0
  %520 = vmatprep.mubr.f32.mxu0 0.0
  %521 = vmatmul.mubr.f32.gmra.mrb[0].mxu0 %v49
  %v522 = vpop.f32.mrb[0].mxu0
  %v523 = vadd.f32 0.0, %v522
  %v524 = vpop.f32.mrb[0].mxu0
  %525 = vmatprep.mubr.f32.mxu0 0.0
  %526 = vmatmul.mubr.f32.gmra.mrb[0].mxu0 %v52
  %v527 = vpop.f32.mrb[0].mxu0
  %v528 = vadd.f32 0.0, %v527
  %v529 = vpop.f32.mrb[0].mxu0
  %530 = vmatprep.mubr.f32.mxu0 0.0
  %531 = vmatmul.mubr.f32.gmra.mrb[0].mxu0 %v55
  %v532 = vpop.f32.mrb[0].mxu0
  %v533 = vadd.f32 0.0, %v532
  %v534 = vpop.f32.mrb[0].mxu0
  %535 = vdwg.mxu0
  %v537 = vsel %vm251, %v434, 0
  %v540 = vsel %vm251, %v435, 0
  %v543 = vsel %vm251, %v436, 0
  %v546 = vsel %vm251, %v437, 0
  %548 = vmatprep.subr.mxu0 0.0
  %549 = vmatpush1.msra.mxu0 %v439
  %550 = vmatprep.subr.mxu0 0.0
  %551 = vmatpush1.msra.mxu0 %v440
  %552 = vmatprep.subr.mxu0 0.0
  %553 = vmatpush1.msra.mxu0 %v441
  %554 = vmatprep.subr.mxu0 0.0
  %555 = vmatpush1.msra.mxu0 %v442
  %556 = vmatprep.subr.mxu0 0.0
  %557 = vmatpush1.msra.mxu0 %v443
  %558 = vmatprep.subr.mxu0 0.0
  %559 = vmatpush1.msra.mxu0 %v444
  %560 = vmatprep.subr.mxu0 0.0
  %561 = vmatpush1.msra.mxu0 %v445
  %562 = vmatprep.subr.mxu0 0.0
  %563 = vmatpush1.msra.mxu0 %v446
  %564 = vmatprep.subr.mxu0 0.0
  %565 = vmatpush1.msra.mxu0 0.0
  %566 = vmatprep.subr.mxu0 0.0
  %567 = vmatpush1.msra.mxu0 0.0
  %568 = vmatprep.subr.mxu0 0.0
  %569 = vmatpush1.msra.mxu0 0.0
  %570 = vmatprep.subr.mxu0 0.0
  %571 = vmatpush1.msra.mxu0 0.0
  %572 = vmatprep.subr.mxu0 0.0
  %573 = vmatpush1.msra.mxu0 0.0
  %574 = vmatprep.subr.mxu0 0.0
  %575 = vmatpush1.msra.mxu0 0.0
  %576 = vmatprep.subr.mxu0 0.0
  %577 = vmatpush1.msra.mxu0 0.0
  %578 = vmatprep.subr.mxu0 0.0
  %579 = vmatpush1.msra.mxu0 0.0
  %580 = vmatprep.subr.mxu0 0.0
  %581 = vmatpush1.msra.mxu0 0.0
  %582 = vmatprep.subr.mxu0 0.0
  %583 = vmatpush1.msra.mxu0 0.0
  %584 = vmatprep.subr.mxu0 0.0
  %585 = vmatpush1.msra.mxu0 0.0
  %586 = vmatprep.subr.mxu0 0.0
  %587 = vmatpush1.msra.mxu0 0.0
  %588 = vmatprep.subr.mxu0 0.0
  %589 = vmatpush1.msra.mxu0 0.0
  %590 = vmatprep.subr.mxu0 0.0
  %591 = vmatpush1.msra.mxu0 0.0
  %592 = vmatprep.subr.mxu0 0.0
  %593 = vmatpush1.msra.mxu0 0.0
  %594 = vmatprep.subr.mxu0 0.0
  %595 = vmatpush1.msra.mxu0 0.0
  %596 = vmatprep.subr.mxu0 0.0
  %597 = vmatpush1.msra.mxu0 0.0
  %598 = vmatprep.subr.mxu0 0.0
  %599 = vmatpush1.msra.mxu0 0.0
  %600 = vmatprep.subr.mxu0 0.0
  %601 = vmatpush1.msra.mxu0 0.0
  %602 = vmatprep.subr.mxu0 0.0
  %603 = vmatpush1.msra.mxu0 0.0
  %604 = vmatprep.subr.mxu0 0.0
  %605 = vmatpush1.msra.mxu0 0.0
  %606 = vmatprep.subr.mxu0 0.0
  %607 = vmatpush1.msra.mxu0 0.0
  %608 = vmatprep.subr.mxu0 0.0
  %609 = vmatpush1.msra.mxu0 0.0
  %610 = vmatprep.subr.mxu0 0.0
  %611 = vmatpush1.msra.mxu0 0.0
  %612 = vmatprep.mubr.f32.mxu0 0.0
  %613 = vmatmul.mubr.f32.gmra.mrb[0].mxu0 %v537
  %v614 = vpop.f32.mrb[0].mxu0
  %v615 = vadd.f32 %v518, %v614
  %v616 = vpop.f32.mrb[0].mxu0
  %617 = vmatprep.mubr.f32.mxu0 0.0
  %618 = vmatmul.mubr.f32.gmra.mrb[0].mxu0 %v540
  %v619 = vpop.f32.mrb[0].mxu0
  %v620 = vadd.f32 %v523, %v619
  %v621 = vpop.f32.mrb[0].mxu0
  %622 = vmatprep.mubr.f32.mxu0 0.0
  %623 = vmatmul.mubr.f32.gmra.mrb[0].mxu0 %v543
  %v624 = vpop.f32.mrb[0].mxu0
  %v625 = vadd.f32 %v528, %v624
  %v626 = vpop.f32.mrb[0].mxu0
  %627 = vmatprep.mubr.f32.mxu0 0.0
  %628 = vmatmul.mubr.f32.gmra.mrb[0].mxu0 %v546
  %v629 = vpop.f32.mrb[0].mxu0
  %v630 = vadd.f32 %v533, %v629
  %v631 = vpop.f32.mrb[0].mxu0
  %632 = vdwg.mxu0
  %v633 = vlaneseq
  %v634 = vshrl.u32 %v633, 7
  %v635 = vsub.s32 0, %v634
  %v636 = vrot.slane %v438, %v635
  %v637 = vadd.f32 %v615, %v636
  %v638 = vadd.f32 %v620, %v636
  %v639 = vadd.f32 %v625, %v636
  %v640 = vadd.f32 %v630, %v636
  %v641 = vmax.f32 %v637, 0.0
  %v642 = vmax.f32 %v638, 0.0
  %v643 = vmax.f32 %v639, 0.0
  %v644 = vmax.f32 %v640, 0.0
  %v645 = vld [vmem:[%s6] sm:$0xff]
  %v646 = vld [vmem:[%s6 + $0x8] sm:$0xff]
  %v647 = vld [vmem:[%s6 + $0x10] sm:$0xff]
  %v648 = vld [vmem:[%s6 + $0x18] sm:$0xff]
  %v649 = vld [vmem:[%s6 + $0x20] sm:$0xff]
  %v650 = vld [vmem:[%s6 + $0x28] sm:$0xff]
  %v651 = vld [vmem:[%s6 + $0x30] sm:$0xff]
  %v652 = vld [vmem:[%s6 + $0x38] sm:$0xff]
  %v653 = vld [vmem:[%s6 + $0x40] sm:$0xff]
  %v654 = vld [vmem:[%s6 + $0x48] sm:$0xff]
  %v655 = vld [vmem:[%s6 + $0x50] sm:$0xff]
  %v656 = vld [vmem:[%s6 + $0x58] sm:$0xff]
  %v657 = vld [vmem:[%s6 + $0x60] sm:$0xff]
  %v658 = vld [vmem:[%s6 + $0x68] sm:$0xff]
  %v659 = vld [vmem:[%s6 + $0x70] sm:$0xff]
  %v660 = vld [vmem:[%s6 + $0x78] sm:$0xff]
  %661 = vmatprep.subr.mxu0 0.0
  %662 = vmatpush1.msra.mxu0 %v645
  %663 = vmatprep.subr.mxu0 0.0
  %664 = vmatpush1.msra.mxu0 %v646
  %665 = vmatprep.subr.mxu0 0.0
  %666 = vmatpush1.msra.mxu0 %v647
  %667 = vmatprep.subr.mxu0 0.0
  %668 = vmatpush1.msra.mxu0 %v648
  %669 = vmatprep.subr.mxu0 0.0
  %670 = vmatpush1.msra.mxu0 %v649
  %671 = vmatprep.subr.mxu0 0.0
  %672 = vmatpush1.msra.mxu0 %v650
  %673 = vmatprep.subr.mxu0 0.0
  %674 = vmatpush1.msra.mxu0 %v651
  %675 = vmatprep.subr.mxu0 0.0
  %676 = vmatpush1.msra.mxu0 %v652
  %677 = vmatprep.subr.mxu0 0.0
  %678 = vmatpush1.msra.mxu0 %v653
  %679 = vmatprep.subr.mxu0 0.0
  %680 = vmatpush1.msra.mxu0 %v654
  %681 = vmatprep.subr.mxu0 0.0
  %682 = vmatpush1.msra.mxu0 %v655
  %683 = vmatprep.subr.mxu0 0.0
  %684 = vmatpush1.msra.mxu0 %v656
  %685 = vmatprep.subr.mxu0 0.0
  %686 = vmatpush1.msra.mxu0 %v657
  %687 = vmatprep.subr.mxu0 0.0
  %688 = vmatpush1.msra.mxu0 %v658
  %689 = vmatprep.subr.mxu0 0.0
  %690 = vmatpush1.msra.mxu0 %v659
  %691 = vmatprep.subr.mxu0 0.0
  %692 = vmatpush1.msra.mxu0 %v660
  %693 = vmatprep.subr.mxu0 0.0
  %694 = vmatpush1.msra.mxu0 0.0
  %695 = vmatprep.subr.mxu0 0.0
  %696 = vmatpush1.msra.mxu0 0.0
  %697 = vmatprep.subr.mxu0 0.0
  %698 = vmatpush1.msra.mxu0 0.0
  %699 = vmatprep.subr.mxu0 0.0
  %700 = vmatpush1.msra.mxu0 0.0
  %701 = vmatprep.subr.mxu0 0.0
  %702 = vmatpush1.msra.mxu0 0.0
  %703 = vmatprep.subr.mxu0 0.0
  %704 = vmatpush1.msra.mxu0 0.0
  %705 = vmatprep.subr.mxu0 0.0
  %706 = vmatpush1.msra.mxu0 0.0
  %707 = vmatprep.subr.mxu0 0.0
  %708 = vmatpush1.msra.mxu0 0.0
  %709 = vmatprep.subr.mxu0 0.0
  %710 = vmatpush1.msra.mxu0 0.0
  %711 = vmatprep.subr.mxu0 0.0
  %712 = vmatpush1.msra.mxu0 0.0
  %713 = vmatprep.subr.mxu0 0.0
  %714 = vmatpush1.msra.mxu0 0.0
  %715 = vmatprep.subr.mxu0 0.0
  %716 = vmatpush1.msra.mxu0 0.0
  %717 = vmatprep.subr.mxu0 0.0
  %718 = vmatpush1.msra.mxu0 0.0
  %719 = vmatprep.subr.mxu0 0.0
  %720 = vmatpush1.msra.mxu0 0.0
  %721 = vmatprep.subr.mxu0 0.0
  %722 = vmatpush1.msra.mxu0 0.0
  %723 = vmatprep.subr.mxu0 0.0
  %724 = vmatpush1.msra.mxu0 0.0
  %725 = vmatprep.mubr.f32.mxu0 0.0
  %726 = vmatmul.mubr.f32.gmra.mrb[0].mxu0 %v641
  %v727 = vpop.f32.mrb[0].mxu0
  %v728 = vadd.f32 0.0, %v727
  %v729 = vpop.f32.mrb[0].mxu0
  %730 = vmatprep.mubr.f32.mxu0 0.0
  %731 = vmatmul.mubr.f32.gmra.mrb[0].mxu0 %v642
  %v732 = vpop.f32.mrb[0].mxu0
  %v733 = vadd.f32 0.0, %v732
  %v734 = vpop.f32.mrb[0].mxu0
  %735 = vmatprep.mubr.f32.mxu0 0.0
  %736 = vmatmul.mubr.f32.gmra.mrb[0].mxu0 %v643
  %v737 = vpop.f32.mrb[0].mxu0
  %v738 = vadd.f32 0.0, %v737
  %v739 = vpop.f32.mrb[0].mxu0
  %740 = vmatprep.mubr.f32.mxu0 0.0
  %741 = vmatmul.mubr.f32.gmra.mrb[0].mxu0 %v644
  %v742 = vpop.f32.mrb[0].mxu0
  %v743 = vadd.f32 0.0, %v742
  %v744 = vpop.f32.mrb[0].mxu0
  %745 = vdwg.mxu0
  %v746 = vmul.f32 %v641, %v641
  %v747 = vmul.f32 %v642, %v642
  %v748 = vmul.f32 %v643, %v643
  %v749 = vmul.f32 %v644, %v644
  %750 = vmatprep.subr.mxu0 0.0
  %751 = vmatpush1.msra.mxu0 %v645
  %752 = vmatprep.subr.mxu0 0.0
  %753 = vmatpush1.msra.mxu0 %v646
  %754 = vmatprep.subr.mxu0 0.0
  %755 = vmatpush1.msra.mxu0 %v647
  %756 = vmatprep.subr.mxu0 0.0
  %757 = vmatpush1.msra.mxu0 %v648
  %758 = vmatprep.subr.mxu0 0.0
  %759 = vmatpush1.msra.mxu0 %v649
  %760 = vmatprep.subr.mxu0 0.0
  %761 = vmatpush1.msra.mxu0 %v650
  %762 = vmatprep.subr.mxu0 0.0
  %763 = vmatpush1.msra.mxu0 %v651
  %764 = vmatprep.subr.mxu0 0.0
  %765 = vmatpush1.msra.mxu0 %v652
  %766 = vmatprep.subr.mxu0 0.0
  %767 = vmatpush1.msra.mxu0 %v653
  %768 = vmatprep.subr.mxu0 0.0
  %769 = vmatpush1.msra.mxu0 %v654
  %770 = vmatprep.subr.mxu0 0.0
  %771 = vmatpush1.msra.mxu0 %v655
  %772 = vmatprep.subr.mxu0 0.0
  %773 = vmatpush1.msra.mxu0 %v656
  %774 = vmatprep.subr.mxu0 0.0
  %775 = vmatpush1.msra.mxu0 %v657
  %776 = vmatprep.subr.mxu0 0.0
  %777 = vmatpush1.msra.mxu0 %v658
  %778 = vmatprep.subr.mxu0 0.0
  %779 = vmatpush1.msra.mxu0 %v659
  %780 = vmatprep.subr.mxu0 0.0
  %781 = vmatpush1.msra.mxu0 %v660
  %782 = vmatprep.subr.mxu0 0.0
  %783 = vmatpush1.msra.mxu0 0.0
  %784 = vmatprep.subr.mxu0 0.0
  %785 = vmatpush1.msra.mxu0 0.0
  %786 = vmatprep.subr.mxu0 0.0
  %787 = vmatpush1.msra.mxu0 0.0
  %788 = vmatprep.subr.mxu0 0.0
  %789 = vmatpush1.msra.mxu0 0.0
  %790 = vmatprep.subr.mxu0 0.0
  %791 = vmatpush1.msra.mxu0 0.0
  %792 = vmatprep.subr.mxu0 0.0
  %793 = vmatpush1.msra.mxu0 0.0
  %794 = vmatprep.subr.mxu0 0.0
  %795 = vmatpush1.msra.mxu0 0.0
  %796 = vmatprep.subr.mxu0 0.0
  %797 = vmatpush1.msra.mxu0 0.0
  %798 = vmatprep.subr.mxu0 0.0
  %799 = vmatpush1.msra.mxu0 0.0
  %800 = vmatprep.subr.mxu0 0.0
  %801 = vmatpush1.msra.mxu0 0.0
  %802 = vmatprep.subr.mxu0 0.0
  %803 = vmatpush1.msra.mxu0 0.0
  %804 = vmatprep.subr.mxu0 0.0
  %805 = vmatpush1.msra.mxu0 0.0
  %806 = vmatprep.subr.mxu0 0.0
  %807 = vmatpush1.msra.mxu0 0.0
  %808 = vmatprep.subr.mxu0 0.0
  %809 = vmatpush1.msra.mxu0 0.0
  %810 = vmatprep.subr.mxu0 0.0
  %811 = vmatpush1.msra.mxu0 0.0
  %812 = vmatprep.subr.mxu0 0.0
  %813 = vmatpush1.msra.mxu0 0.0
  %814 = vmatprep.mubr.f32.mxu0 0.0
  %815 = vmatmul.mubr.f32.gmra.mrb[0].mxu0 %v746
  %v816 = vpop.f32.mrb[0].mxu0
  %v817 = vadd.f32 0.0, %v816
  %v818 = vpop.f32.mrb[0].mxu0
  %819 = vmatprep.mubr.f32.mxu0 0.0
  %820 = vmatmul.mubr.f32.gmra.mrb[0].mxu0 %v747
  %v821 = vpop.f32.mrb[0].mxu0
  %v822 = vadd.f32 0.0, %v821
  %v823 = vpop.f32.mrb[0].mxu0
  %824 = vmatprep.mubr.f32.mxu0 0.0
  %825 = vmatmul.mubr.f32.gmra.mrb[0].mxu0 %v748
  %v826 = vpop.f32.mrb[0].mxu0
  %v827 = vadd.f32 0.0, %v826
  %v828 = vpop.f32.mrb[0].mxu0
  %829 = vmatprep.mubr.f32.mxu0 0.0
  %830 = vmatmul.mubr.f32.gmra.mrb[0].mxu0 %v749
  %v831 = vpop.f32.mrb[0].mxu0
  %v832 = vadd.f32 0.0, %v831
  %v833 = vpop.f32.mrb[0].mxu0
  %834 = vdwg.mxu0
  %v835 = vmul.f32 %v728, %v728
  %v836 = vmul.f32 %v733, %v733
  %v837 = vmul.f32 %v738, %v738
  %v838 = vmul.f32 %v743, %v743
  %v839 = vsub.f32 %v817, %v835
  %v840 = vsub.f32 %v822, %v836
  %v841 = vsub.f32 %v827, %v837
  %v842 = vsub.f32 %v832, %v838
  %v843 = vsub.f32 %v641, %v728
  %v844 = vsub.f32 %v642, %v733
  %v845 = vsub.f32 %v643, %v738
  %v846 = vsub.f32 %v644, %v743
  %v847 = vadd.f32 %v839, 1e-05
  %v848 = vadd.f32 %v840, 1e-05
  %v849 = vadd.f32 %v841, 1e-05
  %v850 = vadd.f32 %v842, 1e-05
  %v851 = vrsqrt.pop %v847
  %v852 = vrsqrt.pop %v848
  %v853 = vrsqrt.pop %v849
  %v854 = vrsqrt.pop %v850
  %v855 = vmul.f32 %v843, %v851
  %v856 = vmul.f32 %v844, %v852
  %v857 = vmul.f32 %v845, %v853
  %v858 = vmul.f32 %v846, %v854
  %v859 = vlaneseq
  %v860 = vshrl.u32 %v859, 7
  %v861 = vsub.s32 1, %v860
  %v862 = vrot.slane %v438, %v861
  %v863 = vmul.f32 %v855, %v862
  %v864 = vmul.f32 %v856, %v862
  %v865 = vmul.f32 %v857, %v862
  %v866 = vmul.f32 %v858, %v862
  %v867 = vlaneseq
  %v868 = vshrl.u32 %v867, 7
  %v869 = vsub.s32 2, %v868
  %v870 = vrot.slane %v438, %v869
  %v871 = vadd.f32 %v863, %v870
  %v872 = vadd.f32 %v864, %v870
  %v873 = vadd.f32 %v865, %v870
  %v874 = vadd.f32 %v866, %v870
  %v875 = vld [vmem:[%s7] sm:$0xff]
  %v876 = vld [vmem:[%s7 + $0x8] sm:$0xff]
  %v877 = vld [vmem:[%s7 + $0x10] sm:$0xff]
  %v878 = vld [vmem:[%s7 + $0x18] sm:$0xff]
  %v879 = vld [vmem:[%s7 + $0x20] sm:$0xff]
  %v880 = vld [vmem:[%s7 + $0x28] sm:$0xff]
  %v881 = vld [vmem:[%s7 + $0x30] sm:$0xff]
  %v882 = vld [vmem:[%s7 + $0x38] sm:$0xff]
  %v883 = vld [vmem:[%s7 + $0x40] sm:$0xff]
  %v884 = vld [vmem:[%s7 + $0x48] sm:$0xff]
  %v885 = vld [vmem:[%s7 + $0x50] sm:$0xff]
  %v886 = vld [vmem:[%s7 + $0x58] sm:$0xff]
  %v887 = vld [vmem:[%s7 + $0x60] sm:$0xff]
  %v888 = vld [vmem:[%s7 + $0x68] sm:$0xff]
  %v889 = vld [vmem:[%s7 + $0x70] sm:$0xff]
  %v890 = vld [vmem:[%s7 + $0x78] sm:$0xff]
  %v891 = vlaneseq
  %v892 = vshrl.u32 %v891, 7
  %v893 = vsub.s32 3, %v892
  %v894 = vrot.slane %v438, %v893
  %895 = vmatprep.subr.mxu0 0.0
  %896 = vmatpush1.msra.mxu0 %v875
  %897 = vmatprep.subr.mxu0 0.0
  %898 = vmatpush1.msra.mxu0 %v876
  %899 = vmatprep.subr.mxu0 0.0
  %900 = vmatpush1.msra.mxu0 %v877
  %901 = vmatprep.subr.mxu0 0.0
  %902 = vmatpush1.msra.mxu0 %v878
  %903 = vmatprep.subr.mxu0 0.0
  %904 = vmatpush1.msra.mxu0 %v879
  %905 = vmatprep.subr.mxu0 0.0
  %906 = vmatpush1.msra.mxu0 %v880
  %907 = vmatprep.subr.mxu0 0.0
  %908 = vmatpush1.msra.mxu0 %v881
  %909 = vmatprep.subr.mxu0 0.0
  %910 = vmatpush1.msra.mxu0 %v882
  %911 = vmatprep.subr.mxu0 0.0
  %912 = vmatpush1.msra.mxu0 %v883
  %913 = vmatprep.subr.mxu0 0.0
  %914 = vmatpush1.msra.mxu0 %v884
  %915 = vmatprep.subr.mxu0 0.0
  %916 = vmatpush1.msra.mxu0 %v885
  %917 = vmatprep.subr.mxu0 0.0
  %918 = vmatpush1.msra.mxu0 %v886
  %919 = vmatprep.subr.mxu0 0.0
  %920 = vmatpush1.msra.mxu0 %v887
  %921 = vmatprep.subr.mxu0 0.0
  %922 = vmatpush1.msra.mxu0 %v888
  %923 = vmatprep.subr.mxu0 0.0
  %924 = vmatpush1.msra.mxu0 %v889
  %925 = vmatprep.subr.mxu0 0.0
  %926 = vmatpush1.msra.mxu0 %v890
  %927 = vmatprep.subr.mxu0 0.0
  %928 = vmatpush1.msra.mxu0 0.0
  %929 = vmatprep.subr.mxu0 0.0
  %930 = vmatpush1.msra.mxu0 0.0
  %931 = vmatprep.subr.mxu0 0.0
  %932 = vmatpush1.msra.mxu0 0.0
  %933 = vmatprep.subr.mxu0 0.0
  %934 = vmatpush1.msra.mxu0 0.0
  %935 = vmatprep.subr.mxu0 0.0
  %936 = vmatpush1.msra.mxu0 0.0
  %937 = vmatprep.subr.mxu0 0.0
  %938 = vmatpush1.msra.mxu0 0.0
  %939 = vmatprep.subr.mxu0 0.0
  %940 = vmatpush1.msra.mxu0 0.0
  %941 = vmatprep.subr.mxu0 0.0
  %942 = vmatpush1.msra.mxu0 0.0
  %943 = vmatprep.subr.mxu0 0.0
  %944 = vmatpush1.msra.mxu0 0.0
  %945 = vmatprep.subr.mxu0 0.0
  %946 = vmatpush1.msra.mxu0 0.0
  %947 = vmatprep.subr.mxu0 0.0
  %948 = vmatpush1.msra.mxu0 0.0
  %949 = vmatprep.subr.mxu0 0.0
  %950 = vmatpush1.msra.mxu0 0.0
  %951 = vmatprep.subr.mxu0 0.0
  %952 = vmatpush1.msra.mxu0 0.0
  %953 = vmatprep.subr.mxu0 0.0
  %954 = vmatpush1.msra.mxu0 0.0
  %955 = vmatprep.subr.mxu0 0.0
  %956 = vmatpush1.msra.mxu0 0.0
  %957 = vmatprep.subr.mxu0 0.0
  %958 = vmatpush1.msra.mxu0 0.0
  %959 = vmatprep.mubr.f32.mxu0 0.0
  %960 = vmatmul.mubr.f32.gmra.mrb[0].mxu0 %v871
  %v961 = vpop.f32.mrb[0].mxu0
  %v962 = vadd.f32 %v894, %v961
  %v963 = vpop.f32.mrb[0].mxu0
  %964 = vmatprep.mubr.f32.mxu0 0.0
  %965 = vmatmul.mubr.f32.gmra.mrb[0].mxu0 %v872
  %v966 = vpop.f32.mrb[0].mxu0
  %v967 = vadd.f32 %v894, %v966
  %v968 = vpop.f32.mrb[0].mxu0
  %969 = vmatprep.mubr.f32.mxu0 0.0
  %970 = vmatmul.mubr.f32.gmra.mrb[0].mxu0 %v873
  %v971 = vpop.f32.mrb[0].mxu0
  %v972 = vadd.f32 %v894, %v971
  %v973 = vpop.f32.mrb[0].mxu0
  %974 = vmatprep.mubr.f32.mxu0 0.0
  %975 = vmatmul.mubr.f32.gmra.mrb[0].mxu0 %v874
  %v976 = vpop.f32.mrb[0].mxu0
  %v977 = vadd.f32 %v894, %v976
  %v978 = vpop.f32.mrb[0].mxu0
  %979 = vdwg.mxu0
  %vm980 = vcmask 31744
  %981 = vst.msk [vmem:[%s9] sm:$0xff] %vm980, %v962
  %982 = vst.msk [vmem:[%s9 + $0x8] sm:$0xff] %vm980, %v967
  %983 = vst.msk [vmem:[%s9 + $0x10] sm:$0xff] %vm980, %v972
  %984 = vst.msk [vmem:[%s9 + $0x18] sm:$0xff] %vm980, %v977
  // Predicated region
  $region38: #{mcstgcn_forward.1} parent=0 // pred_check
    _
  $region39: #{mcstgcn_forward.1} parent=0 // pred_check_branch
    %986 = sbr.rel (0) target = $region41
  $region40: #{mcstgcn_forward.1} parent=0 // pred_region
    _
  $region41: #{mcstgcn_forward.1} parent=0 // pred_fallthru
    _
  // Predicated region
  $region42: #{mcstgcn_forward.1} parent=0 // pred_check
    _
  $region43: #{mcstgcn_forward.1} parent=0 // pred_check_branch
    %988 = sbr.rel (0) target = $region45
  $region44: #{mcstgcn_forward.1} parent=0 // pred_region
    _
  $region45: #{mcstgcn_forward.1} parent=0 // pred_fallthru
    _

</llo_original>
